<compile_context>
chip_gen: v6e
topology: v6e:2x2x1
jax: 0.10.0
libtpu: 0.0.40
codegen_flags: <defaults>
</compile_context>

<pallas_src>
import jax
import jax.numpy as jnp
from jax.experimental import pallas as pl
from jax.experimental.pallas import tpu as pltpu


def _qmlp_kernel(obs_ref, act_ref,
                 w1o_ref, w1a_ref, b1_ref,
                 w2_ref, b2_ref,
                 w3_ref, b3_ref,
                 o_ref):
    """One batch tile of the Q-MLP, feature-major (batch tile in lanes).

    obs_ref : (obs_dim, TB) bf16      act_ref : (act_dim, TB) bf16
    w1o/w1a : (H1, obs_dim)/(H1, act_dim) bf16   b1 : (H1, 1) f32
    w2      : (H2, H1) bf16                      b2 : (H2, 1) f32
    w3      : (1, H2)  bf16                      b3 : (1, 1)  f32
    o_ref   : (1, TB) f32
    """
    # Layer 1: W1 @ concat(obs, act) == W1o @ obs + W1a @ act  (f32 accumulate).
    h = jnp.dot(w1o_ref[...], obs_ref[...], preferred_element_type=jnp.float32)
    h = h + jnp.dot(w1a_ref[...], act_ref[...], preferred_element_type=jnp.float32)
    h = jnp.maximum(h + b1_ref[...], 0.0)                        # (H1, TB) f32
    # Layer 2 + ReLU.
    h = jnp.dot(w2_ref[...], h.astype(jnp.bfloat16),
                preferred_element_type=jnp.float32) + b2_ref[...]
    h = jnp.maximum(h, 0.0)                                       # (H2, TB) f32
    # Output layer (identity activation): lane-dense (1, H2) @ (H2, TB).
    q = jnp.dot(w3_ref[...], h.astype(jnp.bfloat16),
                preferred_element_type=jnp.float32) + b3_ref[...]
    o_ref[...] = q                                                # (1, TB) f32


def init_mlp_q_params(key, obs_dim, act_dim, hidden_sizes):
    """nn.Linear-style init U(-1/sqrt(fan_in), +); torch (out, in) weight layout."""
    sizes = [obs_dim + act_dim] + list(hidden_sizes) + [1]
    params = []
    for j in range(len(sizes) - 1):
        fan_in, fan_out = sizes[j], sizes[j + 1]
        key, kw, kb = jax.random.split(key, 3)
        bound = 1.0 / jnp.sqrt(jnp.float32(fan_in))
        w = jax.random.uniform(kw, (fan_out, fan_in), jnp.float32, -bound, bound)
        b = jax.random.uniform(kb, (fan_out,), jnp.float32, -bound, bound)
        params += [w, b]
    return params


_BATCH_TILE = 512  # rows per grid step; tiny VMEM footprint, amortizes per-step overhead


def _round_up(x, m):
    return ((x + m - 1) // m) * m


@jax.jit
def mlp_q_forward(obs, act, w1, b1, w2, b2, w3, b3):
    """obs: (B, obs_dim), act: (B, act_dim) -> q: (B,) float32."""
    obs = obs.astype(jnp.float32)
    act = act.astype(jnp.float32)
    B, obs_dim = obs.shape
    act_dim = act.shape[1]
    h1, h2 = w1.shape[0], w2.shape[0]

    # Split W1 into obs / act column groups (replaces the wrapper concat).
    w1o = w1[:, :obs_dim].astype(jnp.bfloat16)
    w1a = w1[:, obs_dim:].astype(jnp.bfloat16)
    w2b = w2.astype(jnp.bfloat16)
    w3b = w3.astype(jnp.bfloat16)
    b1c = b1.reshape(h1, 1).astype(jnp.float32)
    b2c = b2.reshape(h2, 1).astype(jnp.float32)
    b3c = b3.reshape(1, 1).astype(jnp.float32)

    # Feature-major (batch-in-lanes) activations, bf16 for the MXU.
    obs_t = obs.astype(jnp.bfloat16).T   # (obs_dim, B)
    act_t = act.astype(jnp.bfloat16).T   # (act_dim, B)

    # Batch tiling: always pad the batch (lane) axis to a multiple of 128 so
    # loads/stores are lane-dense; large batches are tiled at _BATCH_TILE.
    tb = min(_BATCH_TILE, _round_up(B, 128))
    b_pad = _round_up(B, tb)
    if b_pad != B:
        pad = b_pad - B
        obs_t = jnp.pad(obs_t, ((0, 0), (0, pad)))
        act_t = jnp.pad(act_t, ((0, 0), (0, pad)))

    def const2d(shape):
        return pl.BlockSpec(shape, lambda i: (0, 0))   # VMEM-resident across steps

    q = pl.pallas_call(
        _qmlp_kernel,
        out_shape=jax.ShapeDtypeStruct((1, b_pad), jnp.float32),
        grid=(b_pad // tb,),
        in_specs=[
            pl.BlockSpec((obs_dim, tb), lambda i: (0, i)),
            pl.BlockSpec((act_dim, tb), lambda i: (0, i)),
            const2d(w1o.shape), const2d(w1a.shape), const2d(b1c.shape),
            const2d(w2b.shape), const2d(b2c.shape),
            const2d(w3b.shape), const2d(b3c.shape),
        ],
        out_specs=pl.BlockSpec((1, tb), lambda i: (0, i)),
        compiler_params=pltpu.CompilerParams(
            dimension_semantics=("parallel",)),   # lets v7x shard tiles across its 2 TCs
    )(obs_t, act_t, w1o, w1a, b1c, w2b, b2c, w3b, b3c)

    # torch.squeeze(q, -1): kernel output is lane-dense (1, B_pad); drop the
    # leading axis and slice off any batch-padding tail columns.
    return q[0, :B]


if __name__ == "__main__":
    key = jax.random.PRNGKey(0)

    # Small shapes consistent with the module: obs_dim, act_dim, hidden_sizes, batch.
    batch, obs_dim, act_dim = 8, 16, 8
    hidden_sizes = (32, 32)

    kp, ko, ka = jax.random.split(key, 3)
    params = init_mlp_q_params(kp, obs_dim, act_dim, hidden_sizes)
    obs = jax.random.normal(ko, (batch, obs_dim), jnp.float32)
    act = jax.random.normal(ka, (batch, act_dim), jnp.float32)

    q = mlp_q_forward(obs, act, *params)
    jax.block_until_ready(q)
    assert q.shape == (batch,), q.shape

    w1, b1, w2, b2, w3, b3 = params
    x = jnp.concatenate([obs, act], axis=-1)

    # Reference with the kernel's numerics (bf16 matmul operands, f32 accumulate).
    def mm(a, b):
        return jnp.dot(a.astype(jnp.bfloat16), b.astype(jnp.bfloat16),
                       preferred_element_type=jnp.float32)
    h = jnp.maximum(mm(x, w1.T) + b1, 0.0)
    h = jnp.maximum(mm(h, w2.T) + b2, 0.0)
    q_ref = jnp.squeeze(mm(h, w3.T) + b3, axis=-1)
    assert jnp.allclose(q, q_ref, atol=1e-4, rtol=1e-4), \
        float(jnp.max(jnp.abs(q - q_ref)))

    # Loose check against the full-f32 reference (bf16 MXU inputs cause the gap).
    h32 = jnp.maximum(x @ w1.T + b1, 0.0)
    h32 = jnp.maximum(h32 @ w2.T + b2, 0.0)
    q32 = jnp.squeeze(h32 @ w3.T + b3, axis=-1)
    assert jnp.allclose(q, q32, atol=1e-1, rtol=1e-1), \
        float(jnp.max(jnp.abs(q - q32)))

    print("KERNEL_OK")
</pallas_src>

<mosaic_0001>
module attributes {stable_mosaic.version = 11 : i64} {
  func.func @_qmlp_kernel(%arg0: i32, %arg1: memref<16x128xbf16, #tpu.memory_space<vmem>>, %arg2: memref<8x128xbf16, #tpu.memory_space<vmem>>, %arg3: memref<32x16xbf16, #tpu.memory_space<vmem>>, %arg4: memref<32x8xbf16, #tpu.memory_space<vmem>>, %arg5: memref<32x1xf32, #tpu.memory_space<vmem>>, %arg6: memref<32x32xbf16, #tpu.memory_space<vmem>>, %arg7: memref<32x1xf32, #tpu.memory_space<vmem>>, %arg8: memref<1x32xbf16, #tpu.memory_space<vmem>>, %arg9: memref<1x1xf32, #tpu.memory_space<vmem>>, %arg10: memref<1x128xf32, #tpu.memory_space<vmem>>) attributes {dimension_semantics = [#tpu.dimension_semantics<parallel>], iteration_bounds = array<i64: 1>, scalar_prefetch = 0 : i64, scratch_operands = 0 : i64, tpu.core_type = #tpu.core_type<tc>, window_params = [{transform_indices = @transform_0, window_bounds = array<i64: 16, 128>}, {transform_indices = @transform_1, window_bounds = array<i64: 8, 128>}, {pipeline_mode = #tpu.pipeline_mode<synchronous>, transform_indices = @transform_2, window_bounds = array<i64: 32, 16>}, {pipeline_mode = #tpu.pipeline_mode<synchronous>, transform_indices = @transform_3, window_bounds = array<i64: 32, 8>}, {pipeline_mode = #tpu.pipeline_mode<synchronous>, transform_indices = @transform_4, window_bounds = array<i64: 32, 1>}, {pipeline_mode = #tpu.pipeline_mode<synchronous>, transform_indices = @transform_5, window_bounds = array<i64: 32, 32>}, {pipeline_mode = #tpu.pipeline_mode<synchronous>, transform_indices = @transform_6, window_bounds = array<i64: 32, 1>}, {pipeline_mode = #tpu.pipeline_mode<synchronous>, transform_indices = @transform_7, window_bounds = array<i64: 1, 32>}, {pipeline_mode = #tpu.pipeline_mode<synchronous>, transform_indices = @transform_8, window_bounds = array<i64: 1, 1>}, {transform_indices = @transform_9, window_bounds = array<i64: 1, 128>}]} {
    %c0 = arith.constant 0 : index
    %c0_0 = arith.constant 0 : index
    %0 = vector.load %arg3[%c0, %c0_0] : memref<32x16xbf16, #tpu.memory_space<vmem>>, vector<32x16xbf16>
    %c0_1 = arith.constant 0 : index
    %c0_2 = arith.constant 0 : index
    %1 = vector.load %arg1[%c0_1, %c0_2] : memref<16x128xbf16, #tpu.memory_space<vmem>>, vector<16x128xbf16>
    %cst = arith.constant dense<0.000000e+00> : vector<32x128xf32>
    %2 = tpu.matmul %0, %1, %cst {dimension_numbers = #tpu.dot_dimension_numbers<[1], [0], [0], [1], [0, 0, 1, 1], [], []>} : vector<32x16xbf16>, vector<16x128xbf16>, vector<32x128xf32> -> vector<32x128xf32>
    %c0_3 = arith.constant 0 : index
    %c0_4 = arith.constant 0 : index
    %3 = vector.load %arg4[%c0_3, %c0_4] : memref<32x8xbf16, #tpu.memory_space<vmem>>, vector<32x8xbf16>
    %c0_5 = arith.constant 0 : index
    %c0_6 = arith.constant 0 : index
    %4 = vector.load %arg2[%c0_5, %c0_6] : memref<8x128xbf16, #tpu.memory_space<vmem>>, vector<8x128xbf16>
    %cst_7 = arith.constant dense<0.000000e+00> : vector<32x128xf32>
    %5 = tpu.matmul %3, %4, %cst_7 {dimension_numbers = #tpu.dot_dimension_numbers<[1], [0], [0], [1], [0, 0, 1, 1], [], []>} : vector<32x8xbf16>, vector<8x128xbf16>, vector<32x128xf32> -> vector<32x128xf32>
    %6 = arith.addf %2, %5 : vector<32x128xf32>
    %c0_8 = arith.constant 0 : index
    %c0_9 = arith.constant 0 : index
    %7 = vector.load %arg5[%c0_8, %c0_9] : memref<32x1xf32, #tpu.memory_space<vmem>>, vector<32x1xf32>
    %8 = vector.broadcast %7 : vector<32x1xf32> to vector<32x128xf32>
    %9 = arith.addf %6, %8 : vector<32x128xf32>
    %cst_10 = arith.constant 0.000000e+00 : f32
    %10 = vector.broadcast %cst_10 : f32 to vector<32x128xf32>
    %11 = arith.maximumf %9, %10 : vector<32x128xf32>
    %c0_11 = arith.constant 0 : index
    %c0_12 = arith.constant 0 : index
    %12 = vector.load %arg6[%c0_11, %c0_12] : memref<32x32xbf16, #tpu.memory_space<vmem>>, vector<32x32xbf16>
    %13 = arith.truncf %11 : vector<32x128xf32> to vector<32x128xbf16>
    %cst_13 = arith.constant dense<0.000000e+00> : vector<32x128xf32>
    %14 = tpu.matmul %12, %13, %cst_13 {dimension_numbers = #tpu.dot_dimension_numbers<[1], [0], [0], [1], [0, 0, 1, 1], [], []>} : vector<32x32xbf16>, vector<32x128xbf16>, vector<32x128xf32> -> vector<32x128xf32>
    %c0_14 = arith.constant 0 : index
    %c0_15 = arith.constant 0 : index
    %15 = vector.load %arg7[%c0_14, %c0_15] : memref<32x1xf32, #tpu.memory_space<vmem>>, vector<32x1xf32>
    %16 = vector.broadcast %15 : vector<32x1xf32> to vector<32x128xf32>
    %17 = arith.addf %14, %16 : vector<32x128xf32>
    %cst_16 = arith.constant 0.000000e+00 : f32
    %18 = vector.broadcast %cst_16 : f32 to vector<32x128xf32>
    %19 = arith.maximumf %17, %18 : vector<32x128xf32>
    %c0_17 = arith.constant 0 : index
    %c0_18 = arith.constant 0 : index
    %20 = vector.load %arg8[%c0_17, %c0_18] : memref<1x32xbf16, #tpu.memory_space<vmem>>, vector<1x32xbf16>
    %21 = arith.truncf %19 : vector<32x128xf32> to vector<32x128xbf16>
    %cst_19 = arith.constant dense<0.000000e+00> : vector<1x128xf32>
    %22 = tpu.matmul %20, %21, %cst_19 {dimension_numbers = #tpu.dot_dimension_numbers<[1], [0], [0], [1], [0, 0, 1, 1], [], []>} : vector<1x32xbf16>, vector<32x128xbf16>, vector<1x128xf32> -> vector<1x128xf32>
    %c0_20 = arith.constant 0 : index
    %c0_21 = arith.constant 0 : index
    %23 = vector.load %arg9[%c0_20, %c0_21] : memref<1x1xf32, #tpu.memory_space<vmem>>, vector<1x1xf32>
    %24 = vector.broadcast %23 : vector<1x1xf32> to vector<1x128xf32>
    %25 = arith.addf %22, %24 : vector<1x128xf32>
    %c0_22 = arith.constant 0 : index
    %c0_23 = arith.constant 0 : index
    %26 = vector.load %arg10[%c0_22, %c0_23] : memref<1x128xf32, #tpu.memory_space<vmem>>, vector<1x128xf32>
    tpu.vector_store %arg10[%c0_22, %c0_23], %25 {strides = array<i32>} : memref<1x128xf32, #tpu.memory_space<vmem>>, vector<1x128xf32>,
    return
  }
  func.func @transform_0(%arg0: i32) -> (i32, i32) {
    %c0_i32 = arith.constant 0 : i32
    %c0_i32_0 = arith.constant 0 : i32
    return %c0_i32, %arg0 : i32, i32
  }
  func.func @transform_1(%arg0: i32) -> (i32, i32) {
    %c0_i32 = arith.constant 0 : i32
    %c0_i32_0 = arith.constant 0 : i32
    return %c0_i32, %arg0 : i32, i32
  }
  func.func @transform_2(%arg0: i32) -> (i32, i32) {
    %c0_i32 = arith.constant 0 : i32
    %c0_i32_0 = arith.constant 0 : i32
    %c0_i32_1 = arith.constant 0 : i32
    return %c0_i32, %c0_i32_0 : i32, i32
  }
  func.func @transform_3(%arg0: i32) -> (i32, i32) {
    %c0_i32 = arith.constant 0 : i32
    %c0_i32_0 = arith.constant 0 : i32
    %c0_i32_1 = arith.constant 0 : i32
    return %c0_i32, %c0_i32_0 : i32, i32
  }
  func.func @transform_4(%arg0: i32) -> (i32, i32) {
    %c0_i32 = arith.constant 0 : i32
    %c0_i32_0 = arith.constant 0 : i32
    %c0_i32_1 = arith.constant 0 : i32
    return %c0_i32, %c0_i32_0 : i32, i32
  }
  func.func @transform_5(%arg0: i32) -> (i32, i32) {
    %c0_i32 = arith.constant 0 : i32
    %c0_i32_0 = arith.constant 0 : i32
    %c0_i32_1 = arith.constant 0 : i32
    return %c0_i32, %c0_i32_0 : i32, i32
  }
  func.func @transform_6(%arg0: i32) -> (i32, i32) {
    %c0_i32 = arith.constant 0 : i32
    %c0_i32_0 = arith.constant 0 : i32
    %c0_i32_1 = arith.constant 0 : i32
    return %c0_i32, %c0_i32_0 : i32, i32
  }
  func.func @transform_7(%arg0: i32) -> (i32, i32) {
    %c0_i32 = arith.constant 0 : i32
    %c0_i32_0 = arith.constant 0 : i32
    %c0_i32_1 = arith.constant 0 : i32
    return %c0_i32, %c0_i32_0 : i32, i32
  }
  func.func @transform_8(%arg0: i32) -> (i32, i32) {
    %c0_i32 = arith.constant 0 : i32
    %c0_i32_0 = arith.constant 0 : i32
    %c0_i32_1 = arith.constant 0 : i32
    return %c0_i32, %c0_i32_0 : i32, i32
  }
  func.func @transform_9(%arg0: i32) -> (i32, i32) {
    %c0_i32 = arith.constant 0 : i32
    %c0_i32_0 = arith.constant 0 : i32
    return %c0_i32, %arg0 : i32, i32
  }
}

</mosaic_0001>

<llo_original>
// kernel: mlp_q_forward.1
$region0: #{mlp_q_forward.1}
  #allocation0 [shape = 'u32[]', space=smem, size = 0x4, offset = 0x4, fixed_abs, tag = 'smem constant byte address 0x4 - core index']
  #allocation1 [shape = 'u32[144,128]{1,0:T(1,128)}', space=vmem, size = 0x12000, scoped, tag = 'internal scratch']
  #allocation2 [shape = 'f32[1,1]{1,0:T(1,128)S(1)}', space=vmem, size = 0x200, scoped, tag = 'scoped memory for mlp_q_forward.1']
  %s0 = inlined_call_operand.vmem [shape: bf16[16,128], index: 0, kind: input, shape index: {}]
  %s1 = inlined_call_operand.vmem [shape: bf16[8,128], index: 1, kind: input, shape index: {}]
  %s2 = inlined_call_operand.vmem [shape: bf16[32,16], index: 2, kind: input, shape index: {}]
  %s3 = inlined_call_operand.vmem [shape: bf16[32,8], index: 3, kind: input, shape index: {}]
  %s4 = inlined_call_operand.vmem [shape: f32[32,1], index: 4, kind: input, shape index: {}]
  %s5 = inlined_call_operand.vmem [shape: bf16[32,32], index: 5, kind: input, shape index: {}]
  %s6 = inlined_call_operand.vmem [shape: f32[32,1], index: 6, kind: input, shape index: {}]
  %s7 = inlined_call_operand.vmem [shape: bf16[1,32], index: 7, kind: input, shape index: {}]
  %s8 = inlined_call_operand.<no memory space> [shape: f32[1,1], index: 8, kind: input, shape index: {}]
  %s9 = inlined_call_operand.vmem [shape: f32[1,128], index: 9, kind: output, shape index: {}]
  %s10 = sld [smem:[#allocation0]]
  $region46: #{mlp_q_forward.1} parent=0
    _
  %s12 = ssub.s32 1, %s10
  %s13 = scalar_select 0, %s12, %s10
  %v14 = vstv %s8
  %15 = vst [vmem:[#allocation2] sm:$0x1] %v14
  // Predicated region
  $region2: #{mlp_q_forward.1} parent=0 // pred_check
    _
  $region3: #{mlp_q_forward.1} parent=0 // pred_check_branch
    %17 = sbr.rel (0) target = $region5
  $region4: #{mlp_q_forward.1} parent=0 // pred_region
    _
  $region5: #{mlp_q_forward.1} parent=0 // pred_fallthru
    _
  // Predicated region
  $region6: #{mlp_q_forward.1} parent=0 // pred_check
    _
  $region7: #{mlp_q_forward.1} parent=0 // pred_check_branch
    %19 = sbr.rel (0) target = $region9
  $region8: #{mlp_q_forward.1} parent=0 // pred_region
    _
  $region9: #{mlp_q_forward.1} parent=0 // pred_fallthru
    _
  // Predicated region
  $region10: #{mlp_q_forward.1} parent=0 // pred_check
    _
  $region11: #{mlp_q_forward.1} parent=0 // pred_check_branch
    %21 = sbr.rel (0) target = $region13
  $region12: #{mlp_q_forward.1} parent=0 // pred_region
    _
  $region13: #{mlp_q_forward.1} parent=0 // pred_fallthru
    _
  // Predicated region
  $region14: #{mlp_q_forward.1} parent=0 // pred_check
    _
  $region15: #{mlp_q_forward.1} parent=0 // pred_check_branch
    %23 = sbr.rel (0) target = $region17
  $region16: #{mlp_q_forward.1} parent=0 // pred_region
    _
  $region17: #{mlp_q_forward.1} parent=0 // pred_fallthru
    _
  // Predicated region
  $region18: #{mlp_q_forward.1} parent=0 // pred_check
    _
  $region19: #{mlp_q_forward.1} parent=0 // pred_check_branch
    %25 = sbr.rel (0) target = $region21
  $region20: #{mlp_q_forward.1} parent=0 // pred_region
    _
  $region21: #{mlp_q_forward.1} parent=0 // pred_fallthru
    _
  // Predicated region
  $region22: #{mlp_q_forward.1} parent=0 // pred_check
    _
  $region23: #{mlp_q_forward.1} parent=0 // pred_check_branch
    %27 = sbr.rel (0) target = $region25
  $region24: #{mlp_q_forward.1} parent=0 // pred_region
    _
  $region25: #{mlp_q_forward.1} parent=0 // pred_fallthru
    _
  // Predicated region
  $region26: #{mlp_q_forward.1} parent=0 // pred_check
    _
  $region27: #{mlp_q_forward.1} parent=0 // pred_check_branch
    %29 = sbr.rel (0) target = $region29
  $region28: #{mlp_q_forward.1} parent=0 // pred_region
    _
  $region29: #{mlp_q_forward.1} parent=0 // pred_fallthru
    _
  // Predicated region
  $region30: #{mlp_q_forward.1} parent=0 // pred_check
    _
  $region31: #{mlp_q_forward.1} parent=0 // pred_check_branch
    %31 = sbr.rel (0) target = $region33
  $region32: #{mlp_q_forward.1} parent=0 // pred_region
    _
  $region33: #{mlp_q_forward.1} parent=0 // pred_fallthru
    _
  // Predicated region
  $region34: #{mlp_q_forward.1} parent=0 // pred_check
    _
  $region35: #{mlp_q_forward.1} parent=0 // pred_check_branch
    %33 = sbr.rel (0) target = $region37
  $region36: #{mlp_q_forward.1} parent=0 // pred_region
    _
  $region37: #{mlp_q_forward.1} parent=0 // pred_fallthru
    _
  %v35 = vld [vmem:[%s2] sm:$0xf]
  %v36 = vld [vmem:[%s2 + $0x4] sm:$0xf]
  %v37 = vld [vmem:[%s2 + $0x8] sm:$0xf]
  %v38 = vld [vmem:[%s2 + $0xc] sm:$0xf]
  %v39 = vld [vmem:[%s0] sm:$0xf]
  %v40 = vld [vmem:[%s0 + $0x4] sm:$0xf]
  %v41 = vld [vmem:[%s3] sm:$0xf]
  %v42 = vld [vmem:[%s3 + $0x4] sm:$0xf]
  %v43 = vld [vmem:[%s3 + $0x8] sm:$0xf]
  %v44 = vld [vmem:[%s3 + $0xc] sm:$0xf]
  %v45 = vld [vmem:[%s1] sm:$0xf]
  %v50 = vunpack.c.l.b16 %v41
  %v51 = vunpack.c.l.b16 %v42
  %v52 = vunpack.c.l.b16 %v43
  %v53 = vunpack.c.l.b16 %v44
  %v54 = vpack.c.b16 %v51, %v50
  %v55 = vpack.c.b16 %v53, %v52
  %vm56 = vcmask 64512
  %v58 = vsel %vm56, %v54, 0
  %v61 = vsel %vm56, %v55, 0
  %vm63 = vcmask 1043456
  %v65 = vsel %vm63, %v45, 0
  %67 = vmatprep.subr.bf16.mxu0 0
  %68 = vmatpush1.bf16.msra.mxu0 0
  %69 = vmatprep.subr.bf16.mxu0 0
  %70 = vmatpush1.bf16.msra.mxu0 0
  %71 = vmatprep.subr.bf16.mxu0 0
  %72 = vmatpush1.bf16.msra.mxu0 0
  %73 = vmatprep.subr.bf16.mxu0 0
  %74 = vmatpush1.bf16.msra.mxu0 0
  %75 = vmatprep.subr.bf16.mxu0 0
  %76 = vmatpush1.bf16.msra.mxu0 0
  %77 = vmatprep.subr.bf16.mxu0 0
  %78 = vmatpush1.bf16.msra.mxu0 0
  %79 = vmatprep.subr.bf16.mxu0 0
  %80 = vmatpush1.bf16.msra.mxu0 0
  %81 = vmatprep.subr.bf16.mxu0 0
  %82 = vmatpush1.bf16.msra.mxu0 %v65
  %83 = vmatprep.subr.bf16.mxu0 0
  %84 = vmatpush2.bf16.msra.mxu0 0
  %85 = vmatprep.subr.bf16.mxu0 0
  %86 = vmatpush2.bf16.msra.mxu0 0
  %87 = vmatprep.subr.bf16.mxu0 0
  %88 = vmatpush2.bf16.msra.mxu0 0
  %89 = vmatprep.subr.bf16.mxu0 0
  %90 = vmatpush2.bf16.msra.mxu0 0
  %91 = vmatprep.subr.bf16.mxu0 0
  %92 = vmatpush2.bf16.msra.mxu0 0
  %93 = vmatprep.subr.bf16.mxu0 0
  %94 = vmatpush2.bf16.msra.mxu0 0
  %95 = vmatprep.subr.bf16.mxu0 0
  %96 = vmatpush2.bf16.msra.mxu0 0
  %97 = vmatprep.subr.bf16.mxu0 0
  %98 = vmatpush2.bf16.msra.mxu0 0
  %99 = vmatprep.mubr.bf16.mxu0 0
  %100 = vmatmul.mubr.bf16.gmra.mxu0 %v58
  %v101 = vpop.f32.mrf.mxu0
  %v102 = vadd.f32 0.0, %v101
  %v103 = vpop.f32.mrf.mxu0
  %v104 = vpop.f32.mrf.mxu0
  %v105 = vadd.f32 0.0, %v104
  %v106 = vpop.f32.mrf.mxu0
  %107 = vmatprep.mubr.bf16.mxu0 0
  %108 = vmatmul.mubr.bf16.gmra.mxu0 %v61
  %v109 = vpop.f32.mrf.mxu0
  %v110 = vadd.f32 0.0, %v109
  %v111 = vpop.f32.mrf.mxu0
  %v112 = vpop.f32.mrf.mxu0
  %v113 = vadd.f32 0.0, %v112
  %v114 = vpop.f32.mrf.mxu0
  %115 = vdwg.mxu0
  %v120 = vunpack.c.l.b16 %v35
  %v121 = vunpack.c.l.b16 %v36
  %v122 = vunpack.c.l.b16 %v37
  %v123 = vunpack.c.l.b16 %v38
  %v124 = vpack.c.b16 %v121, %v120
  %v125 = vpack.c.b16 %v123, %v122
  %v128 = vunpack.c.l.b16 %v39
  %v129 = vunpack.c.l.b16 %v40
  %v130 = vpack.c.b16 %v129, %v128
  %vm132 = vcmask 130048
  %v134 = vsel %vm132, %v124, 0
  %v137 = vsel %vm132, %v125, 0
  %139 = vmatprep.subr.bf16.mxu0 0
  %140 = vmatpush1.bf16.msra.mxu0 0
  %141 = vmatprep.subr.bf16.mxu0 0
  %142 = vmatpush1.bf16.msra.mxu0 0
  %143 = vmatprep.subr.bf16.mxu0 0
  %144 = vmatpush1.bf16.msra.mxu0 0
  %145 = vmatprep.subr.bf16.mxu0 0
  %146 = vmatpush1.bf16.msra.mxu0 0
  %147 = vmatprep.subr.bf16.mxu0 0
  %148 = vmatpush1.bf16.msra.mxu0 0
  %149 = vmatprep.subr.bf16.mxu0 0
  %150 = vmatpush1.bf16.msra.mxu0 0
  %151 = vmatprep.subr.bf16.mxu0 0
  %152 = vmatpush1.bf16.msra.mxu0 0
  %153 = vmatprep.subr.bf16.mxu0 0
  %154 = vmatpush1.bf16.msra.mxu0 %v130
  %155 = vmatprep.subr.bf16.mxu0 0
  %156 = vmatpush2.bf16.msra.mxu0 0
  %157 = vmatprep.subr.bf16.mxu0 0
  %158 = vmatpush2.bf16.msra.mxu0 0
  %159 = vmatprep.subr.bf16.mxu0 0
  %160 = vmatpush2.bf16.msra.mxu0 0
  %161 = vmatprep.subr.bf16.mxu0 0
  %162 = vmatpush2.bf16.msra.mxu0 0
  %163 = vmatprep.subr.bf16.mxu0 0
  %164 = vmatpush2.bf16.msra.mxu0 0
  %165 = vmatprep.subr.bf16.mxu0 0
  %166 = vmatpush2.bf16.msra.mxu0 0
  %167 = vmatprep.subr.bf16.mxu0 0
  %168 = vmatpush2.bf16.msra.mxu0 0
  %169 = vmatprep.subr.bf16.mxu0 0
  %170 = vmatpush2.bf16.msra.mxu0 0
  %171 = vmatprep.mubr.bf16.mxu0 0
  %172 = vmatmul.mubr.bf16.gmra.mxu0 %v134
  %v173 = vpop.f32.mrf.mxu0
  %v174 = vadd.f32 %v102, %v173
  %v175 = vpop.f32.mrf.mxu0
  %v176 = vpop.f32.mrf.mxu0
  %v177 = vadd.f32 %v105, %v176
  %v178 = vpop.f32.mrf.mxu0
  %179 = vmatprep.mubr.bf16.mxu0 0
  %180 = vmatmul.mubr.bf16.gmra.mxu0 %v137
  %v181 = vpop.f32.mrf.mxu0
  %v182 = vadd.f32 %v110, %v181
  %v183 = vpop.f32.mrf.mxu0
  %v184 = vpop.f32.mrf.mxu0
  %v185 = vadd.f32 %v113, %v184
  %v186 = vpop.f32.mrf.mxu0
  %187 = vdwg.mxu0
  %v188 = vld [vmem:[%s4] sm:$0xff]
  %v189 = vld [vmem:[%s4 + $0x8] sm:$0xff]
  %v190 = vld [vmem:[%s4 + $0x10] sm:$0xff]
  %v191 = vld [vmem:[%s4 + $0x18] sm:$0xff]
  %193 = vset.pattern.permute.xlu0 0
  %194 = vperm.xlu0 %193, %v188
  %v195 = vpop.permute.xlu0 %194
  %198 = vset.pattern.permute.xlu0 0
  %199 = vperm.xlu0 %198, %v189
  %v200 = vpop.permute.xlu0 %199
  %203 = vset.pattern.permute.xlu0 0
  %204 = vperm.xlu0 %203, %v190
  %v205 = vpop.permute.xlu0 %204
  %208 = vset.pattern.permute.xlu0 0
  %209 = vperm.xlu0 %208, %v191
  %v210 = vpop.permute.xlu0 %209
  %v212 = vadd.f32 %v174, %v195
  %v213 = vadd.f32 %v177, %v200
  %v214 = vadd.f32 %v182, %v205
  %v215 = vadd.f32 %v185, %v210
  %v216 = vmax.f32 %v212, 0.0
  %v217 = vmax.f32 %v213, 0.0
  %v218 = vmax.f32 %v214, 0.0
  %v219 = vmax.f32 %v215, 0.0
  %v220 = vld [vmem:[%s5] sm:$0xf]
  %v221 = vld [vmem:[%s5 + $0x4] sm:$0xf]
  %v222 = vld [vmem:[%s5 + $0x8] sm:$0xf]
  %v223 = vld [vmem:[%s5 + $0xc] sm:$0xf]
  %v224 = vpack.c.bf16 %v217, %v216
  %v225 = vpack.c.bf16 %v219, %v218
  %v226 = vld [vmem:[%s6] sm:$0xff]
  %v227 = vld [vmem:[%s6 + $0x8] sm:$0xff]
  %v228 = vld [vmem:[%s6 + $0x10] sm:$0xff]
  %v229 = vld [vmem:[%s6 + $0x18] sm:$0xff]
  %231 = vset.pattern.permute.xlu0 0
  %232 = vperm.xlu0 %231, %v226
  %v233 = vpop.permute.xlu0 %232
  %236 = vset.pattern.permute.xlu0 0
  %237 = vperm.xlu0 %236, %v227
  %v238 = vpop.permute.xlu0 %237
  %241 = vset.pattern.permute.xlu0 0
  %242 = vperm.xlu0 %241, %v228
  %v243 = vpop.permute.xlu0 %242
  %246 = vset.pattern.permute.xlu0 0
  %247 = vperm.xlu0 %246, %v229
  %v248 = vpop.permute.xlu0 %247
  %v254 = vunpack.c.l.b16 %v220
  %v255 = vunpack.c.l.b16 %v221
  %v256 = vunpack.c.l.b16 %v222
  %v257 = vunpack.c.l.b16 %v223
  %v258 = vpack.c.b16 %v255, %v254
  %v259 = vpack.c.b16 %v257, %v256
  %vm260 = vcmask 261120
  %v262 = vsel %vm260, %v258, 0
  %v265 = vsel %vm260, %v259, 0
  %267 = vmatprep.subr.bf16.mxu0 0
  %268 = vmatpush1.bf16.msra.mxu0 0
  %269 = vmatprep.subr.bf16.mxu0 0
  %270 = vmatpush1.bf16.msra.mxu0 0
  %271 = vmatprep.subr.bf16.mxu0 0
  %272 = vmatpush1.bf16.msra.mxu0 0
  %273 = vmatprep.subr.bf16.mxu0 0
  %274 = vmatpush1.bf16.msra.mxu0 0
  %275 = vmatprep.subr.bf16.mxu0 0
  %276 = vmatpush1.bf16.msra.mxu0 0
  %277 = vmatprep.subr.bf16.mxu0 0
  %278 = vmatpush1.bf16.msra.mxu0 0
  %279 = vmatprep.subr.bf16.mxu0 0
  %280 = vmatpush1.bf16.msra.mxu0 %v225
  %281 = vmatprep.subr.bf16.mxu0 0
  %282 = vmatpush1.bf16.msra.mxu0 %v224
  %283 = vmatprep.subr.bf16.mxu0 0
  %284 = vmatpush2.bf16.msra.mxu0 0
  %285 = vmatprep.subr.bf16.mxu0 0
  %286 = vmatpush2.bf16.msra.mxu0 0
  %287 = vmatprep.subr.bf16.mxu0 0
  %288 = vmatpush2.bf16.msra.mxu0 0
  %289 = vmatprep.subr.bf16.mxu0 0
  %290 = vmatpush2.bf16.msra.mxu0 0
  %291 = vmatprep.subr.bf16.mxu0 0
  %292 = vmatpush2.bf16.msra.mxu0 0
  %293 = vmatprep.subr.bf16.mxu0 0
  %294 = vmatpush2.bf16.msra.mxu0 0
  %295 = vmatprep.subr.bf16.mxu0 0
  %296 = vmatpush2.bf16.msra.mxu0 0
  %297 = vmatprep.subr.bf16.mxu0 0
  %298 = vmatpush2.bf16.msra.mxu0 0
  %299 = vmatprep.mubr.bf16.mxu0 0
  %300 = vmatmul.mubr.bf16.gmra.mxu0 %v262
  %v301 = vpop.f32.mrf.mxu0
  %v302 = vadd.f32 %v233, %v301
  %v303 = vpop.f32.mrf.mxu0
  %v304 = vpop.f32.mrf.mxu0
  %v305 = vadd.f32 %v238, %v304
  %v306 = vpop.f32.mrf.mxu0
  %307 = vmatprep.mubr.bf16.mxu0 0
  %308 = vmatmul.mubr.bf16.gmra.mxu0 %v265
  %v309 = vpop.f32.mrf.mxu0
  %v310 = vadd.f32 %v243, %v309
  %v311 = vpop.f32.mrf.mxu0
  %v312 = vpop.f32.mrf.mxu0
  %v313 = vadd.f32 %v248, %v312
  %v314 = vpop.f32.mrf.mxu0
  %315 = vdwg.mxu0
  %v316 = vmax.f32 %v302, 0.0
  %v317 = vmax.f32 %v305, 0.0
  %v318 = vmax.f32 %v310, 0.0
  %v319 = vmax.f32 %v313, 0.0
  %v320 = vld [vmem:[%s7] sm:$0x1]
  %v321 = vpack.c.bf16 %v317, %v316
  %v322 = vpack.c.bf16 %v319, %v318
  %v323 = vld [vmem:[#allocation2] sm:$0x1]
  %325 = vset.pattern.permute.xlu0 0
  %326 = vperm.xlu0 %325, %v323
  %v327 = vpop.permute.xlu0 %326
  %v329 = vlaneseq
  %v330 = vshrl.u32 %v329, 7
  %v331 = vsub.s32 0, %v330
  %v332 = vrot.slane %v327, %v331
  %v334 = vsel %vm260, %v320, 0
  %336 = vmatprep.subr.bf16.mxu0 0
  %337 = vmatpush1.bf16.msra.mxu0 0
  %338 = vmatprep.subr.bf16.mxu0 0
  %339 = vmatpush1.bf16.msra.mxu0 0
  %340 = vmatprep.subr.bf16.mxu0 0
  %341 = vmatpush1.bf16.msra.mxu0 0
  %342 = vmatprep.subr.bf16.mxu0 0
  %343 = vmatpush1.bf16.msra.mxu0 0
  %344 = vmatprep.subr.bf16.mxu0 0
  %345 = vmatpush1.bf16.msra.mxu0 0
  %346 = vmatprep.subr.bf16.mxu0 0
  %347 = vmatpush1.bf16.msra.mxu0 0
  %348 = vmatprep.subr.bf16.mxu0 0
  %349 = vmatpush1.bf16.msra.mxu0 %v322
  %350 = vmatprep.subr.bf16.mxu0 0
  %351 = vmatpush1.bf16.msra.mxu0 %v321
  %352 = vmatprep.subr.bf16.mxu0 0
  %353 = vmatpush2.bf16.msra.mxu0 0
  %354 = vmatprep.subr.bf16.mxu0 0
  %355 = vmatpush2.bf16.msra.mxu0 0
  %356 = vmatprep.subr.bf16.mxu0 0
  %357 = vmatpush2.bf16.msra.mxu0 0
  %358 = vmatprep.subr.bf16.mxu0 0
  %359 = vmatpush2.bf16.msra.mxu0 0
  %360 = vmatprep.subr.bf16.mxu0 0
  %361 = vmatpush2.bf16.msra.mxu0 0
  %362 = vmatprep.subr.bf16.mxu0 0
  %363 = vmatpush2.bf16.msra.mxu0 0
  %364 = vmatprep.subr.bf16.mxu0 0
  %365 = vmatpush2.bf16.msra.mxu0 0
  %366 = vmatprep.subr.bf16.mxu0 0
  %367 = vmatpush2.bf16.msra.mxu0 0
  %368 = vmatprep.mubr.bf16.mxu0 0
  %369 = vmatmul.mubr.bf16.gmra.mxu0 %v334
  %v370 = vpop.f32.mrf.mxu0
  %v371 = vadd.f32 %v332, %v370
  %v372 = vpop.f32.mrf.mxu0
  %v373 = vpop.f32.mrf.mxu0
  %v374 = vpop.f32.mrf.mxu0
  %375 = vdwg.mxu0
  %376 = vst [vmem:[%s9] sm:$0x1] %v371
  // Predicated region
  $region38: #{mlp_q_forward.1} parent=0 // pred_check
    _
  $region39: #{mlp_q_forward.1} parent=0 // pred_check_branch
    %378 = sbr.rel (0) target = $region41
  $region40: #{mlp_q_forward.1} parent=0 // pred_region
    _
  $region41: #{mlp_q_forward.1} parent=0 // pred_fallthru
    _
  // Predicated region
  $region42: #{mlp_q_forward.1} parent=0 // pred_check
    _
  $region43: #{mlp_q_forward.1} parent=0 // pred_check_branch
    %380 = sbr.rel (0) target = $region45
  $region44: #{mlp_q_forward.1} parent=0 // pred_region
    _
  $region45: #{mlp_q_forward.1} parent=0 // pred_fallthru
    _

</llo_original>
